<compile_context>
chip_gen: v7x
topology: tpu7x:2x2x1
jax: 0.10.0
libtpu: 0.0.40
codegen_flags: <defaults>
</compile_context>

<pallas_src>
import jax
import jax.numpy as jnp
from jax.experimental import pallas as pl
from jax.experimental.pallas import tpu as pltpu


def _disc_kernel(xt_ref, w1_ref, b1_ref, w2_ref, b2_ref, o_ref):
    # xt: (N, TB)  batch on lanes
    # w1: (N, N)   fc1.weight in PyTorch (out, in) layout
    # b1: (N, 1)   fc1.bias as a column
    # w2: (N, 1)   fc2.weight as a column
    # b2: (1, 1)   fc2.bias, SMEM scalar
    # o : (1, TB)  lane-dense output
    xt = xt_ref[...]
    w1 = w1_ref[...]
    n = w1.shape[0]

    # ---- layer 1: h^T = sigmoid(W1 @ x^T + b1) ------------------------------
    # num_qubits is tiny, so an unrolled broadcast multiply-add chain on the
    # VPU beats an MXU round-trip; use the MXU only if N is non-trivial.
    if n <= 16:
        acc = b1_ref[...]                                 # (N, 1) -> broadcasts
        for k in range(n):
            acc = acc + w1[:, k:k + 1] * xt[k:k + 1, :]   # (N,1)*(1,TB)->(N,TB)
    else:
        acc = jnp.dot(w1, xt, preferred_element_type=jnp.float32) + b1_ref[...]
    ht = jax.nn.sigmoid(acc)                              # (N, TB)

    # ---- layer 2: y = sigmoid(w2 . h + b2) ----------------------------------
    # VPU multiply + XLU sublane reduction; no 1-column MXU matmul.
    logits = jnp.sum(w2_ref[...] * ht, axis=0, keepdims=True) + b2_ref[0, 0]
    o_ref[...] = jax.nn.sigmoid(logits)                   # (1, TB) lane-dense


def classical_discriminator(x, w1, b1, w2, b2, *, batch_tile=256):
    """Fused 2-layer MLP discriminator.

    x:  (B, N) float32   -- same (batch, features) layout as the PyTorch input.
    w1: (N, N) float32   -- fc1.weight, PyTorch (out, in) layout.
    b1: (N,)   float32   -- fc1.bias.
    w2: (1, N) float32   -- fc2.weight, PyTorch (out, in) layout.
    b2: (1,)   float32   -- fc2.bias.
    Returns (B, 1) float32, matching the PyTorch module.
    """
    B, N = x.shape
    TB = min(batch_tile, B)
    grid = (pl.cdiv(B, TB),)

    xt = x.T                      # (N, B): put batch on the lane axis
    b1c = b1.reshape(N, 1)
    w2c = w2.reshape(N, 1)
    b2s = b2.reshape(1, 1)

    out_t = pl.pallas_call(
        _disc_kernel,
        out_shape=jax.ShapeDtypeStruct((1, B), jnp.float32),
        grid=grid,
        in_specs=[
            pl.BlockSpec((N, TB), lambda i: (0, i)),             # xt, batch-tiled
            pl.BlockSpec((N, N), lambda i: (0, 0)),              # w1, resident
            pl.BlockSpec((N, 1), lambda i: (0, 0)),              # b1, resident
            pl.BlockSpec((N, 1), lambda i: (0, 0)),              # w2, resident
            pl.BlockSpec(memory_space=pltpu.MemorySpace.SMEM),   # b2 scalar
        ],
        out_specs=pl.BlockSpec((1, TB), lambda i: (0, i)),
        compiler_params=pltpu.CompilerParams(
            dimension_semantics=("parallel",)),
    )(xt, w1, b1c, w2c, b2s)

    return out_t.reshape(B, 1)


def _reference(x, w1, b1, w2, b2):
    h = jax.nn.sigmoid(x @ w1.T + b1)
    return jax.nn.sigmoid(h @ w2.T + b2)


if __name__ == "__main__":
    num_qubits = 4
    batch = 8

    key = jax.random.PRNGKey(0)
    kx, k1, kb1, k2, kb2 = jax.random.split(key, 5)

    # Deterministic synthetic parameters in the exact PyTorch nn.Linear layout.
    bound = float(num_qubits) ** -0.5
    x = jax.random.normal(kx, (batch, num_qubits), dtype=jnp.float32)
    w1 = jax.random.uniform(k1, (num_qubits, num_qubits), jnp.float32, -bound, bound)
    b1 = jax.random.uniform(kb1, (num_qubits,), jnp.float32, -bound, bound)
    w2 = jax.random.uniform(k2, (1, num_qubits), jnp.float32, -bound, bound)
    b2 = jax.random.uniform(kb2, (1,), jnp.float32, -bound, bound)

    out = classical_discriminator(x, w1, b1, w2, b2)
    out = jax.block_until_ready(out)

    ref = _reference(x, w1, b1, w2, b2)
    assert out.shape == (batch, 1)
    assert jnp.allclose(out, ref, atol=1e-5, rtol=1e-5)

    print("KERNEL_OK")
</pallas_src>

<mosaic_0001>
module attributes {stable_mosaic.version = 11 : i64} {
  func.func @_disc_kernel(%arg0: i32, %arg1: memref<4x8xf32, #tpu.memory_space<vmem>>, %arg2: memref<4x4xf32, #tpu.memory_space<vmem>>, %arg3: memref<4x1xf32, #tpu.memory_space<vmem>>, %arg4: memref<4x1xf32, #tpu.memory_space<vmem>>, %arg5: memref<1x1xf32, #tpu.memory_space<smem>>, %arg6: memref<1x8xf32, #tpu.memory_space<vmem>>) attributes {dimension_semantics = [#tpu.dimension_semantics<parallel>], iteration_bounds = array<i64: 1>, scalar_prefetch = 0 : i64, scratch_operands = 0 : i64, tpu.core_type = #tpu.core_type<tc>, window_params = [{transform_indices = @transform_0, window_bounds = array<i64: 4, 8>}, {pipeline_mode = #tpu.pipeline_mode<synchronous>, transform_indices = @transform_1, window_bounds = array<i64: 4, 4>}, {pipeline_mode = #tpu.pipeline_mode<synchronous>, transform_indices = @transform_2, window_bounds = array<i64: 4, 1>}, {pipeline_mode = #tpu.pipeline_mode<synchronous>, transform_indices = @transform_3, window_bounds = array<i64: 4, 1>}, {transform_indices = @transform_4, window_bounds = array<i64: 1, 1>}, {transform_indices = @transform_5, window_bounds = array<i64: 1, 8>}]} {
    %c0 = arith.constant 0 : index
    %c0_0 = arith.constant 0 : index
    %0 = vector.load %arg1[%c0, %c0_0] : memref<4x8xf32, #tpu.memory_space<vmem>>, vector<4x8xf32>
    %c0_1 = arith.constant 0 : index
    %c0_2 = arith.constant 0 : index
    %1 = vector.load %arg2[%c0_1, %c0_2] : memref<4x4xf32, #tpu.memory_space<vmem>>, vector<4x4xf32>
    %c0_3 = arith.constant 0 : index
    %c0_4 = arith.constant 0 : index
    %2 = vector.load %arg3[%c0_3, %c0_4] : memref<4x1xf32, #tpu.memory_space<vmem>>, vector<4x1xf32>
    %3 = vector.extract_strided_slice %1 {offsets = [0, 0], sizes = [4, 1], strides = [1, 1]} : vector<4x4xf32> to vector<4x1xf32>
    %4 = vector.extract_strided_slice %0 {offsets = [0, 0], sizes = [1, 8], strides = [1, 1]} : vector<4x8xf32> to vector<1x8xf32>
    %5 = vector.broadcast %3 : vector<4x1xf32> to vector<4x8xf32>
    %6 = vector.broadcast %4 : vector<1x8xf32> to vector<4x8xf32>
    %7 = arith.mulf %5, %6 : vector<4x8xf32>
    %8 = vector.broadcast %2 : vector<4x1xf32> to vector<4x8xf32>
    %9 = arith.addf %8, %7 : vector<4x8xf32>
    %10 = vector.extract_strided_slice %1 {offsets = [0, 1], sizes = [4, 1], strides = [1, 1]} : vector<4x4xf32> to vector<4x1xf32>
    %11 = vector.extract_strided_slice %0 {offsets = [1, 0], sizes = [1, 8], strides = [1, 1]} : vector<4x8xf32> to vector<1x8xf32>
    %12 = vector.broadcast %10 : vector<4x1xf32> to vector<4x8xf32>
    %13 = vector.broadcast %11 : vector<1x8xf32> to vector<4x8xf32>
    %14 = arith.mulf %12, %13 : vector<4x8xf32>
    %15 = arith.addf %9, %14 : vector<4x8xf32>
    %16 = vector.extract_strided_slice %1 {offsets = [0, 2], sizes = [4, 1], strides = [1, 1]} : vector<4x4xf32> to vector<4x1xf32>
    %17 = vector.extract_strided_slice %0 {offsets = [2, 0], sizes = [1, 8], strides = [1, 1]} : vector<4x8xf32> to vector<1x8xf32>
    %18 = vector.broadcast %16 : vector<4x1xf32> to vector<4x8xf32>
    %19 = vector.broadcast %17 : vector<1x8xf32> to vector<4x8xf32>
    %20 = arith.mulf %18, %19 : vector<4x8xf32>
    %21 = arith.addf %15, %20 : vector<4x8xf32>
    %22 = vector.extract_strided_slice %1 {offsets = [0, 3], sizes = [4, 1], strides = [1, 1]} : vector<4x4xf32> to vector<4x1xf32>
    %23 = vector.extract_strided_slice %0 {offsets = [3, 0], sizes = [1, 8], strides = [1, 1]} : vector<4x8xf32> to vector<1x8xf32>
    %24 = vector.broadcast %22 : vector<4x1xf32> to vector<4x8xf32>
    %25 = vector.broadcast %23 : vector<1x8xf32> to vector<4x8xf32>
    %26 = arith.mulf %24, %25 : vector<4x8xf32>
    %27 = arith.addf %21, %26 : vector<4x8xf32>
    %28 = arith.negf %27 : vector<4x8xf32>
    %29 = math.exp %28 : vector<4x8xf32>
    %cst = arith.constant 1.000000e+00 : f32
    %30 = vector.broadcast %cst : f32 to vector<4x8xf32>
    %31 = arith.addf %30, %29 : vector<4x8xf32>
    %32 = arith.divf %30, %31 : vector<4x8xf32>
    %c0_5 = arith.constant 0 : index
    %c0_6 = arith.constant 0 : index
    %33 = vector.load %arg4[%c0_5, %c0_6] : memref<4x1xf32, #tpu.memory_space<vmem>>, vector<4x1xf32>
    %34 = vector.broadcast %33 : vector<4x1xf32> to vector<4x8xf32>
    %35 = arith.mulf %34, %32 : vector<4x8xf32>
    %cst_7 = arith.constant dense<0.000000e+00> : vector<8xf32>
    %36 = vector.multi_reduction <add>, %35, %cst_7 [0] : vector<4x8xf32> to vector<8xf32>
    %37 = vector.shape_cast %36 : vector<8xf32> to vector<1x8xf32>
    %c0_8 = arith.constant 0 : index
    %c0_9 = arith.constant 0 : index
    %38 = memref.load %arg5[%c0_8, %c0_9] : memref<1x1xf32, #tpu.memory_space<smem>>
    %39 = vector.broadcast %38 : f32 to vector<1x8xf32>
    %40 = arith.addf %37, %39 : vector<1x8xf32>
    %41 = arith.negf %40 : vector<1x8xf32>
    %42 = math.exp %41 : vector<1x8xf32>
    %cst_10 = arith.constant 1.000000e+00 : f32
    %43 = vector.broadcast %cst_10 : f32 to vector<1x8xf32>
    %44 = arith.addf %43, %42 : vector<1x8xf32>
    %45 = arith.divf %43, %44 : vector<1x8xf32>
    %c0_11 = arith.constant 0 : index
    %c0_12 = arith.constant 0 : index
    %46 = vector.load %arg6[%c0_11, %c0_12] : memref<1x8xf32, #tpu.memory_space<vmem>>, vector<1x8xf32>
    tpu.vector_store %arg6[%c0_11, %c0_12], %45 {strides = array<i32>} : memref<1x8xf32, #tpu.memory_space<vmem>>, vector<1x8xf32>,
    return
  }
  func.func @transform_0(%arg0: i32) -> (i32, i32) {
    %c0_i32 = arith.constant 0 : i32
    %c0_i32_0 = arith.constant 0 : i32
    return %c0_i32, %arg0 : i32, i32
  }
  func.func @transform_1(%arg0: i32) -> (i32, i32) {
    %c0_i32 = arith.constant 0 : i32
    %c0_i32_0 = arith.constant 0 : i32
    %c0_i32_1 = arith.constant 0 : i32
    return %c0_i32, %c0_i32_0 : i32, i32
  }
  func.func @transform_2(%arg0: i32) -> (i32, i32) {
    %c0_i32 = arith.constant 0 : i32
    %c0_i32_0 = arith.constant 0 : i32
    %c0_i32_1 = arith.constant 0 : i32
    return %c0_i32, %c0_i32_0 : i32, i32
  }
  func.func @transform_3(%arg0: i32) -> (i32, i32) {
    %c0_i32 = arith.constant 0 : i32
    %c0_i32_0 = arith.constant 0 : i32
    %c0_i32_1 = arith.constant 0 : i32
    return %c0_i32, %c0_i32_0 : i32, i32
  }
  func.func @transform_4(%arg0: i32) -> (i32, i32) {
    %c0_i32 = arith.constant 0 : i32
    %c0_i32_0 = arith.constant 0 : i32
    %c0_i32_1 = arith.constant 0 : i32
    return %c0_i32, %c0_i32_0 : i32, i32
  }
  func.func @transform_5(%arg0: i32) -> (i32, i32) {
    %c0_i32 = arith.constant 0 : i32
    %c0_i32_0 = arith.constant 0 : i32
    return %c0_i32, %arg0 : i32, i32
  }
}

</mosaic_0001>

<llo_original>
// kernel: tpu_custom_call.1
$region0: #{tpu_custom_call.1}
  #allocation0 [shape = 'u32[]', space=smem, size = 0x4, offset = 0x4, fixed_abs, tag = 'smem constant byte address 0x4 - core index']
  #allocation1 [shape = 'u32[144,128]{1,0:T(1,128)}', space=vmem, size = 0x12000, scoped, tag = 'internal scratch']
  #allocation2 [shape = 'f32[1,1]{1,0:T(1,128)S(6)}', space=smem, size = 0x200, scoped, tag = 'scoped memory for tpu_custom_call.1']
  %s0 = inlined_call_operand.vmem [shape: f32[4,8], index: 0, kind: input, shape index: {}]
  %s1 = inlined_call_operand.vmem [shape: f32[4,4], index: 1, kind: input, shape index: {}]
  %s2 = inlined_call_operand.vmem [shape: f32[4,1], index: 2, kind: input, shape index: {}]
  %s3 = inlined_call_operand.vmem [shape: f32[4,1], index: 3, kind: input, shape index: {}]
  %s4 = inlined_call_operand.<no memory space> [shape: f32[1,1], index: 4, kind: input, shape index: {}]
  %s5 = inlined_call_operand.hbm [shape: f32[1,8], index: 5, kind: output, shape index: {}]
  %s6 = sld [smem:[#allocation0]]
  $region30: #{tpu_custom_call.1} parent=0
    _
  %s8 = ssub.s32 1, %s6
  %s9 = scalar_select 0, %s8, %s6
  %10 = sst [smem:[#allocation2]] %s4
  $region1: #{tpu_custom_call.1} parent=0
    #allocation3 [shape = 'u8[512]{0}', space=vmem, size = 0x400, scoped, tag = 'output window, operand 0, single buffered']
    #allocation4 [shape = 's32[1]{0}', space=sflag, size = 0x4, scoped, tag = 'scoped memory for tpu_custom_call.1']
    %11 = vsyncpa [#allocation4], 0
    // Predicated region
    $region2: #{tpu_custom_call.1} parent=1 // pred_check
      _
    $region3: #{tpu_custom_call.1} parent=1 // pred_check_branch
      %13 = sbr.rel (0) target = $region5
    $region4: #{tpu_custom_call.1} parent=1 // pred_region
      _
    $region5: #{tpu_custom_call.1} parent=1 // pred_fallthru
      _
    // Predicated region
    $region6: #{tpu_custom_call.1} parent=1 // pred_check
      _
    $region7: #{tpu_custom_call.1} parent=1 // pred_check_branch
      %15 = sbr.rel (0) target = $region9
    $region8: #{tpu_custom_call.1} parent=1 // pred_region
      _
    $region9: #{tpu_custom_call.1} parent=1 // pred_fallthru
      _
    // Predicated region
    $region10: #{tpu_custom_call.1} parent=1 // pred_check
      _
    $region11: #{tpu_custom_call.1} parent=1 // pred_check_branch
      %17 = sbr.rel (0) target = $region13
    $region12: #{tpu_custom_call.1} parent=1 // pred_region
      _
    $region13: #{tpu_custom_call.1} parent=1 // pred_fallthru
      _
    // Predicated region
    $region14: #{tpu_custom_call.1} parent=1 // pred_check
      _
    $region15: #{tpu_custom_call.1} parent=1 // pred_check_branch
      %19 = sbr.rel (0) target = $region17
    $region16: #{tpu_custom_call.1} parent=1 // pred_region
      _
    $region17: #{tpu_custom_call.1} parent=1 // pred_fallthru
      _
    // Predicated region
    $region18: #{tpu_custom_call.1} parent=1 // pred_check
      _
    $region19: #{tpu_custom_call.1} parent=1 // pred_check_branch
      %21 = sbr.rel (0) target = $region21
    $region20: #{tpu_custom_call.1} parent=1 // pred_region
      _
    $region21: #{tpu_custom_call.1} parent=1 // pred_fallthru
      _
    %v22 = vld [vmem:[%s0] sm:$0xf]
    %v23 = vld [vmem:[%s1] sm:$0xf]
    %v24 = vld [vmem:[%s2] sm:$0xf]
    %26 = vset.pattern.permute.xlu0 0
    %27 = vperm.xlu0 %26, %v23
    %v28 = vpop.permute.xlu0 %27
    %v30 = vlaneseq
    %v31 = vshrl.u32 %v30, 7
    %v32 = vsub.s32 0, %v31
    %v33 = vrot.slane %v22, %v32
    %v34 = vmul.f32 %v28, %v33
    %36 = vset.pattern.permute.xlu0 0
    %37 = vperm.xlu0 %36, %v24
    %v38 = vpop.permute.xlu0 %37
    %v40 = vadd.f32 %v38, %v34
    %41 = vset.pattern.permute.xlu0 1
    %42 = vperm.xlu0 %41, %v23
    %v43 = vpop.permute.xlu0 %42
    %v45 = vlaneseq
    %v46 = vshrl.u32 %v45, 7
    %v47 = vsub.s32 1, %v46
    %v48 = vrot.slane %v22, %v47
    %v49 = vmul.f32 %v43, %v48
    %v50 = vadd.f32 %v40, %v49
    %51 = vset.pattern.permute.xlu0 2
    %52 = vperm.xlu0 %51, %v23
    %v53 = vpop.permute.xlu0 %52
    %v55 = vlaneseq
    %v56 = vshrl.u32 %v55, 7
    %v57 = vsub.s32 2, %v56
    %v58 = vrot.slane %v22, %v57
    %v59 = vmul.f32 %v53, %v58
    %v60 = vadd.f32 %v50, %v59
    %61 = vset.pattern.permute.xlu0 3
    %62 = vperm.xlu0 %61, %v23
    %v63 = vpop.permute.xlu0 %62
    %v65 = vlaneseq
    %v66 = vshrl.u32 %v65, 7
    %v67 = vsub.s32 3, %v66
    %v68 = vrot.slane %v22, %v67
    %v69 = vmul.f32 %v63, %v68
    %v70 = vadd.f32 %v60, %v69
    %v71 = vxor.u32 %v70, 2147483648
    %v72 = vmul.f32 %v71, 1.442695
    %v73 = vpow.pop %v72
    %v74 = vadd.f32 %v73, 1.0
    %v75 = vrcp.pop %v74
    %v76 = vmul.f32 1.0, %v75
    %v77 = vld [vmem:[%s3] sm:$0xf]
    %79 = vset.pattern.permute.xlu0 0
    %80 = vperm.xlu0 %79, %v77
    %v81 = vpop.permute.xlu0 %80
    %v83 = vmul.f32 %v81, %v76
    %vm84 = vcmask 60416
    %v85 = vsel %vm84, %v83, 0.0
    %v86 = vrot.slane %v85, 4
    %v87 = vadd.f32 %v85, %v86
    %v88 = vrot.slane %v87, 2
    %v89 = vadd.f32 %v87, %v88
    %v90 = vrot.slane %v89, 1
    %v91 = vadd.f32 %v89, %v90
    %s92 = sld [smem:[#allocation2]]
    %v93 = vstv %s92
    %v94 = vadd.f32 %v91, %v93
    %v95 = vxor.u32 %v94, 2147483648
    %v96 = vmul.f32 %v95, 1.442695
    %v97 = vpow.pop %v96
    %v98 = vadd.f32 %v97, 1.0
    %v99 = vrcp.pop %v98
    %v100 = vmul.f32 1.0, %v99
    %vm101 = vcmask 57344
    %102 = vst.msk [vmem:[#allocation3] sm:$0x1] %vm101, %v100
    // Predicated region
    $region22: #{tpu_custom_call.1} parent=1 // pred_check
      _
    $region23: #{tpu_custom_call.1} parent=1 // pred_check_branch
      %104 = sbr.rel (0) target = $region25
    $region24: #{tpu_custom_call.1} parent=1 // pred_region
      %s106 = ssub.s32 16, 16
      %107 = vsyncadd [#allocation4], %s106
      %s109 = sshll.u32 [#allocation3], 4
      %s110 = int_to_ptr.vmem [resolvable:$true] %s109
      %112 = dma.vmem_to_hbm [thread:$0]  %s110, 16, %s5, [#allocation4]
    $region25: #{tpu_custom_call.1} parent=1 // pred_fallthru
      _
    // Predicated region
    $region26: #{tpu_custom_call.1} parent=1 // pred_check
      _
    $region27: #{tpu_custom_call.1} parent=1 // pred_check_branch
      %114 = sbr.rel (0) target = $region29
    $region28: #{tpu_custom_call.1} parent=1 // pred_region
      %115 = dma.done [#allocation4], 16
    $region29: #{tpu_custom_call.1} parent=1 // pred_fallthru
      _
    %116 = vsyncpa [#allocation4], 1

</llo_original>
